<compile_context>
chip_gen: v6e
topology: v6e:2x2x1
jax: 0.10.0
libtpu: 0.0.40
codegen_flags: <defaults>
</compile_context>

<pallas_src>
import numpy as np
import jax
import jax.numpy as jnp
from jax.experimental import pallas as pl
from jax.experimental.pallas import tpu as pltpu

PARAM_HIDDEN = 128
RATIO_SHRINKAGE = 8
EMB_DIM = PARAM_HIDDEN // RATIO_SHRINKAGE  # 16

NAME_INVARIANT_CURR = [
    'PT_age', 'PT_female', 'HD_type', 'HD_dfr', 'HD_prewt', 'HD_priming', 'HD_dialysate',
    'HD_dialyzer', 'HD_flux', 'HD_surface', 'HD_vascular', 'DM', 'HTN', 'CAD', 'AF', 'LC',
    'GN', 'Cancer', 'Donor', 'Recipient', 'WBC', 'Hb', 'HCT', 'PLT', 'Chol', 'Prot', 'Alb',
    'Tbil', 'AST', 'ALT', 'ALP', 'PT', 'aPTT', 'BUN', 'Cr', 'Na', 'K', 'CO2', 'Cl', 'Phos',
    'Ca', 'UA', 'CRP', 'CysC', 'Glu', 'LDH', 'Anti_HTN', 'Diuretics', 'Statin', 'Anti_PLT',
    'Anti_coag', 'OHA', 'INS', 'EPO', 'UA_lowering', 'Pbinder',
]
N_INVARIANT = len(NAME_INVARIANT_CURR)  # 56

# TODO(synk): the original snippet's categorical-column lists are circularly defined
# (name_invariant_categorical <-> name_invariant_*_categorical) and max_invariant_categorical
# is np.random; we fix a deterministic, clinically sensible categorical set and deterministic
# cardinalities in [2, 9] so the script is self-contained and reproducible.
NAME_CATEGORICAL = [
    'PT_female', 'HD_type', 'HD_priming', 'HD_dialysate', 'HD_dialyzer', 'HD_flux',
    'HD_vascular', 'DM', 'HTN', 'CAD', 'AF', 'LC', 'GN', 'Cancer', 'Donor', 'Recipient',
    'Anti_HTN', 'Diuretics', 'Statin', 'Anti_PLT', 'Anti_coag', 'OHA', 'INS', 'EPO',
    'UA_lowering', 'Pbinder',
]
IDX_CAT = [NAME_INVARIANT_CURR.index(x) for x in NAME_CATEGORICAL]
IDX_CAT_SET = set(IDX_CAT)
MAX_CAT = [2 + (3 * j) % 8 for j in range(len(IDX_CAT))]  # cardinalities in [2, 9]

NE = N_INVARIANT * EMB_DIM  # 896 = 7 * 128 (lane-dense output width)


def _round_up(x, m):
    return ((x + m - 1) // m) * m


# ---------------------------------------------------------------------------
# Pallas kernel
# ---------------------------------------------------------------------------
def embedding_invariant_kernel(x_ref, g_ref, loc_ref, wsel_ref, b_ref, tsel_ref, o_ref):
    x = x_ref[...].astype(jnp.float32)                                     # (TB, N)

    # Continuous features: one fused (TB,N)@(N,896) matmul; categorical rows of Wsel are zero.
    cont = jnp.dot(x, wsel_ref[...], preferred_element_type=jnp.float32) + b_ref[...]

    # Categorical features: scatter each column's (integer-valued) entry onto its slot range,
    xg = jnp.dot(x, g_ref[...], preferred_element_type=jnp.float32)       # (TB, Cp)
    # build the one-hot over the concatenated category axis (nearest-integer match;
    # padded slots carry local index -1 so they never fire),
    onehot = (jnp.abs(xg - loc_ref[...]) < 0.5).astype(jnp.float32)       # (TB, Cp)
    # and read every embedding table at once with a single (TB,Cp)@(Cp,896) matmul.
    cat = jnp.dot(onehot, tsel_ref[...], preferred_element_type=jnp.float32)

    o_ref[...] = (cont + cat).astype(o_ref.dtype)


def embedding_invariant(x, packed, *, row_tile=512):
    """x: [B, 56] float. Returns [B, 56, 16] (same semantics as Embedding_invariant.forward)."""
    wsel, bflat, g, loc, tsel = packed
    B, N = x.shape
    assert N == N_INVARIANT
    Cp = g.shape[1]

    TB = min(row_tile, _round_up(B, 8))
    pB = _round_up(B, TB)
    x = x.astype(jnp.float32)
    if pB != B:
        x = jnp.pad(x, ((0, pB - B), (0, 0)))

    flops = 2 * pB * (N * NE + N * Cp + Cp * NE)
    bytes_accessed = 4 * (pB * N + pB * NE + N * NE + N * Cp + Cp * NE + 2 * NE + Cp)

    out = pl.pallas_call(
        embedding_invariant_kernel,
        out_shape=jax.ShapeDtypeStruct((pB, NE), jnp.float32),
        grid_spec=pltpu.PrefetchScalarGridSpec(
            num_scalar_prefetch=0,
            grid=(pB // TB,),
            in_specs=[
                pl.BlockSpec((TB, N), lambda i: (i, 0)),    # x  (tiled over rows)
                pl.BlockSpec((N, Cp), lambda i: (0, 0)),    # G  scatter matrix  (VMEM-resident)
                pl.BlockSpec((1, Cp), lambda i: (0, 0)),    # slot-local category indices
                pl.BlockSpec((N, NE), lambda i: (0, 0)),    # fused Linear(1,16) weights
                pl.BlockSpec((1, NE), lambda i: (0, 0)),    # fused Linear(1,16) biases
                pl.BlockSpec((Cp, NE), lambda i: (0, 0)),   # fused embedding tables
            ],
            out_specs=pl.BlockSpec((TB, NE), lambda i: (i, 0)),
        ),
        compiler_params=pltpu.CompilerParams(
            dimension_semantics=("parallel",),
        ),
        cost_estimate=pl.CostEstimate(
            flops=flops, transcendentals=0, bytes_accessed=bytes_accessed),
    )(x, g, loc, wsel, bflat, tsel)

    return out[:B].reshape(B, N_INVARIANT, EMB_DIM)


# ---------------------------------------------------------------------------
# Parameter construction / packing / pure-JAX reference
# ---------------------------------------------------------------------------
def init_params(key):
    """Per-feature params mimicking PyTorch defaults: Linear(1,16) ~ U(-1,1), Embedding ~ N(0,1)."""
    keys = jax.random.split(key, 2 * N_INVARIANT)
    w_lin, b_lin, tables = [None] * N_INVARIANT, [None] * N_INVARIANT, {}
    for feat in range(N_INVARIANT):
        kw, kb = keys[2 * feat], keys[2 * feat + 1]
        if feat in IDX_CAT_SET:
            mc = MAX_CAT[IDX_CAT.index(feat)]
            tables[feat] = jax.random.normal(kw, (mc, EMB_DIM), jnp.float32)
        else:
            w_lin[feat] = jax.random.uniform(kw, (EMB_DIM,), jnp.float32, -1.0, 1.0)
            b_lin[feat] = jax.random.uniform(kb, (EMB_DIM,), jnp.float32, -1.0, 1.0)
    return w_lin, b_lin, tables


def pack_params(w_lin, b_lin, tables):
    """Pack the 56 tiny layers into the fused matrices consumed by the kernel."""
    C = int(sum(MAX_CAT))
    Cp = _round_up(max(C, 128), 128)

    wsel = np.zeros((N_INVARIANT, NE), np.float32)
    bflat = np.zeros((1, NE), np.float32)
    g = np.zeros((N_INVARIANT, Cp), np.float32)
    loc = np.full((1, Cp), -1.0, np.float32)
    tsel = np.zeros((Cp, NE), np.float32)

    off = 0
    for j, feat in enumerate(IDX_CAT):
        mc = MAX_CAT[j]
        g[feat, off:off + mc] = 1.0
        loc[0, off:off + mc] = np.arange(mc, dtype=np.float32)
        tsel[off:off + mc, feat * EMB_DIM:(feat + 1) * EMB_DIM] = np.asarray(tables[feat])
        off += mc
    for feat in range(N_INVARIANT):
        if feat not in IDX_CAT_SET:
            wsel[feat, feat * EMB_DIM:(feat + 1) * EMB_DIM] = np.asarray(w_lin[feat])
            bflat[0, feat * EMB_DIM:(feat + 1) * EMB_DIM] = np.asarray(b_lin[feat])

    return (jnp.asarray(wsel), jnp.asarray(bflat), jnp.asarray(g),
            jnp.asarray(loc), jnp.asarray(tsel))


def embedding_invariant_ref(x, w_lin, b_lin, tables):
    """Pure-JAX mirror of the PyTorch per-feature loop."""
    x = x.astype(jnp.float32)
    outs = []
    for feat in range(N_INVARIANT):
        col = x[:, feat]
        if feat in IDX_CAT_SET:
            emb = tables[feat][col.astype(jnp.int32)]                      # (B, 16)
        else:
            emb = col[:, None] * w_lin[feat][None, :] + b_lin[feat][None, :]
        outs.append(emb[:, None, :])
    return jnp.concatenate(outs, axis=1)                                   # (B, 56, 16)


if __name__ == "__main__":
    key = jax.random.PRNGKey(0)
    k_cont, k_cat, k_par = jax.random.split(key, 3)

    B = 16
    # continuous columns ~ N(0,1); categorical columns carry integer category ids (as floats)
    x = jax.random.normal(k_cont, (B, N_INVARIANT), jnp.float32)
    cat_keys = jax.random.split(k_cat, len(IDX_CAT))
    for j, feat in enumerate(IDX_CAT):
        ids = jax.random.randint(cat_keys[j], (B,), 0, MAX_CAT[j])
        x = x.at[:, feat].set(ids.astype(jnp.float32))

    w_lin, b_lin, tables = init_params(k_par)
    packed = pack_params(w_lin, b_lin, tables)

    out = embedding_invariant(x, packed)
    out = jax.block_until_ready(out)

    ref = embedding_invariant_ref(x, w_lin, b_lin, tables)
    assert out.shape == (B, N_INVARIANT, EMB_DIM)
    assert jnp.allclose(out, ref, atol=1e-4, rtol=1e-4), "mismatch vs reference"

    print("KERNEL_OK")
</pallas_src>

<mosaic_0001>
module attributes {stable_mosaic.version = 11 : i64} {
  func.func @embedding_invariant_kernel(%arg0: i32, %arg1: memref<16x56xf32, #tpu.memory_space<vmem>>, %arg2: memref<56x256xf32, #tpu.memory_space<vmem>>, %arg3: memref<1x256xf32, #tpu.memory_space<vmem>>, %arg4: memref<56x896xf32, #tpu.memory_space<vmem>>, %arg5: memref<1x896xf32, #tpu.memory_space<vmem>>, %arg6: memref<256x896xf32, #tpu.memory_space<vmem>>, %arg7: memref<16x896xf32, #tpu.memory_space<vmem>>) attributes {dimension_semantics = [#tpu.dimension_semantics<parallel>], iteration_bounds = array<i64: 1>, scalar_prefetch = 0 : i64, scratch_operands = 0 : i64, tpu.core_type = #tpu.core_type<tc>, window_params = [{transform_indices = @transform_0, window_bounds = array<i64: 16, 56>}, {pipeline_mode = #tpu.pipeline_mode<synchronous>, transform_indices = @transform_1, window_bounds = array<i64: 56, 256>}, {pipeline_mode = #tpu.pipeline_mode<synchronous>, transform_indices = @transform_2, window_bounds = array<i64: 1, 256>}, {pipeline_mode = #tpu.pipeline_mode<synchronous>, transform_indices = @transform_3, window_bounds = array<i64: 56, 896>}, {pipeline_mode = #tpu.pipeline_mode<synchronous>, transform_indices = @transform_4, window_bounds = array<i64: 1, 896>}, {pipeline_mode = #tpu.pipeline_mode<synchronous>, transform_indices = @transform_5, window_bounds = array<i64: 256, 896>}, {transform_indices = @transform_6, window_bounds = array<i64: 16, 896>}]} {
    %c0 = arith.constant 0 : index
    %c0_0 = arith.constant 0 : index
    %0 = vector.load %arg1[%c0, %c0_0] : memref<16x56xf32, #tpu.memory_space<vmem>>, vector<16x56xf32>
    %c0_1 = arith.constant 0 : index
    %c0_2 = arith.constant 0 : index
    %1 = vector.load %arg4[%c0_1, %c0_2] : memref<56x896xf32, #tpu.memory_space<vmem>>, vector<56x896xf32>
    %cst = arith.constant dense<0.000000e+00> : vector<16x896xf32>
    %2 = tpu.matmul %0, %1, %cst {dimension_numbers = #tpu.dot_dimension_numbers<[1], [0], [0], [1], [0, 0, 1, 1], [], []>} : vector<16x56xf32>, vector<56x896xf32>, vector<16x896xf32> -> vector<16x896xf32>
    %c0_3 = arith.constant 0 : index
    %c0_4 = arith.constant 0 : index
    %3 = vector.load %arg5[%c0_3, %c0_4] : memref<1x896xf32, #tpu.memory_space<vmem>>, vector<1x896xf32>
    %4 = vector.broadcast %3 : vector<1x896xf32> to vector<16x896xf32>
    %5 = arith.addf %2, %4 : vector<16x896xf32>
    %c0_5 = arith.constant 0 : index
    %c0_6 = arith.constant 0 : index
    %6 = vector.load %arg2[%c0_5, %c0_6] : memref<56x256xf32, #tpu.memory_space<vmem>>, vector<56x256xf32>
    %cst_7 = arith.constant dense<0.000000e+00> : vector<16x256xf32>
    %7 = tpu.matmul %0, %6, %cst_7 {dimension_numbers = #tpu.dot_dimension_numbers<[1], [0], [0], [1], [0, 0, 1, 1], [], []>} : vector<16x56xf32>, vector<56x256xf32>, vector<16x256xf32> -> vector<16x256xf32>
    %c0_8 = arith.constant 0 : index
    %c0_9 = arith.constant 0 : index
    %8 = vector.load %arg3[%c0_8, %c0_9] : memref<1x256xf32, #tpu.memory_space<vmem>>, vector<1x256xf32>
    %9 = vector.broadcast %8 : vector<1x256xf32> to vector<16x256xf32>
    %10 = arith.subf %7, %9 : vector<16x256xf32>
    %11 = math.absf %10 : vector<16x256xf32>
    %cst_10 = arith.constant 5.000000e-01 : f32
    %12 = vector.broadcast %cst_10 : f32 to vector<16x256xf32>
    %13 = arith.cmpf olt, %11, %12 : vector<16x256xf32>
    %14 = arith.extui %13 : vector<16x256xi1> to vector<16x256xi32>
    %15 = arith.sitofp %14 : vector<16x256xi32> to vector<16x256xf32>
    %c0_11 = arith.constant 0 : index
    %c0_12 = arith.constant 0 : index
    %16 = vector.load %arg6[%c0_11, %c0_12] : memref<256x896xf32, #tpu.memory_space<vmem>>, vector<256x896xf32>
    %cst_13 = arith.constant dense<0.000000e+00> : vector<16x896xf32>
    %17 = tpu.matmul %15, %16, %cst_13 {dimension_numbers = #tpu.dot_dimension_numbers<[1], [0], [0], [1], [0, 0, 1, 1], [], []>} : vector<16x256xf32>, vector<256x896xf32>, vector<16x896xf32> -> vector<16x896xf32>
    %18 = arith.addf %5, %17 : vector<16x896xf32>
    %c0_14 = arith.constant 0 : index
    %c0_15 = arith.constant 0 : index
    %19 = vector.load %arg7[%c0_14, %c0_15] : memref<16x896xf32, #tpu.memory_space<vmem>>, vector<16x896xf32>
    tpu.vector_store %arg7[%c0_14, %c0_15], %18 {strides = array<i32>} : memref<16x896xf32, #tpu.memory_space<vmem>>, vector<16x896xf32>,
    return
  }
  func.func @transform_0(%arg0: i32) -> (i32, i32) {
    %c0_i32 = arith.constant 0 : i32
    %c0_i32_0 = arith.constant 0 : i32
    return %arg0, %c0_i32 : i32, i32
  }
  func.func @transform_1(%arg0: i32) -> (i32, i32) {
    %c0_i32 = arith.constant 0 : i32
    %c0_i32_0 = arith.constant 0 : i32
    %c0_i32_1 = arith.constant 0 : i32
    return %c0_i32, %c0_i32_0 : i32, i32
  }
  func.func @transform_2(%arg0: i32) -> (i32, i32) {
    %c0_i32 = arith.constant 0 : i32
    %c0_i32_0 = arith.constant 0 : i32
    %c0_i32_1 = arith.constant 0 : i32
    return %c0_i32, %c0_i32_0 : i32, i32
  }
  func.func @transform_3(%arg0: i32) -> (i32, i32) {
    %c0_i32 = arith.constant 0 : i32
    %c0_i32_0 = arith.constant 0 : i32
    %c0_i32_1 = arith.constant 0 : i32
    return %c0_i32, %c0_i32_0 : i32, i32
  }
  func.func @transform_4(%arg0: i32) -> (i32, i32) {
    %c0_i32 = arith.constant 0 : i32
    %c0_i32_0 = arith.constant 0 : i32
    %c0_i32_1 = arith.constant 0 : i32
    return %c0_i32, %c0_i32_0 : i32, i32
  }
  func.func @transform_5(%arg0: i32) -> (i32, i32) {
    %c0_i32 = arith.constant 0 : i32
    %c0_i32_0 = arith.constant 0 : i32
    %c0_i32_1 = arith.constant 0 : i32
    return %c0_i32, %c0_i32_0 : i32, i32
  }
  func.func @transform_6(%arg0: i32) -> (i32, i32) {
    %c0_i32 = arith.constant 0 : i32
    %c0_i32_0 = arith.constant 0 : i32
    return %arg0, %c0_i32 : i32, i32
  }
}

</mosaic_0001>

<llo_original>
// kernel: tpu_custom_call.1
$region0: #{tpu_custom_call.1}
  #allocation0 [shape = 'u32[]', space=smem, size = 0x4, offset = 0x4, fixed_abs, tag = 'smem constant byte address 0x4 - core index']
  #allocation1 [shape = 'u32[144,128]{1,0:T(1,128)}', space=vmem, size = 0x12000, scoped, tag = 'internal scratch']
  %s0 = inlined_call_operand.hbm [shape: f32[16,56], index: 0, kind: input, shape index: {}]
  %s1 = inlined_call_operand.hbm [shape: f32[56,256], index: 1, kind: input, shape index: {}]
  %s2 = inlined_call_operand.hbm [shape: f32[1,256], index: 2, kind: input, shape index: {}]
  %s3 = inlined_call_operand.hbm [shape: f32[56,896], index: 3, kind: input, shape index: {}]
  %s4 = inlined_call_operand.vmem [shape: f32[1,896], index: 4, kind: input, shape index: {}]
  %s5 = inlined_call_operand.hbm [shape: f32[256,896], index: 5, kind: input, shape index: {}]
  %s6 = inlined_call_operand.hbm [shape: f32[16,896], index: 6, kind: output, shape index: {}]
  %s7 = sld [smem:[#allocation0]]
  $region54: #{tpu_custom_call.1} parent=0
    _
  %s9 = ssub.s32 1, %s7
  %s10 = scalar_select 0, %s9, %s7
  $region1: #{tpu_custom_call.1} parent=0
    #allocation2 [shape = 'u8[8192]{0}', space=vmem, size = 0x2000, scoped, tag = 'input window, operand 0, single buffered']
    #allocation3 [shape = 's32[1]{0}', space=sflag, size = 0x4, scoped, tag = 'scoped memory for tpu_custom_call.1']
    #allocation4 [shape = 's32[1]{0}', space=sflag, size = 0x4, scoped, tag = 'scoped memory for tpu_custom_call.1']
    #allocation5 [shape = 'u8[57344]{0}', space=vmem, size = 0xe000, scoped, tag = 'input window, operand 1, single buffered']
    #allocation6 [shape = 's32[1]{0}', space=sflag, size = 0x4, scoped, tag = 'scoped memory for tpu_custom_call.1']
    #allocation7 [shape = 'u8[1024]{0}', space=vmem, size = 0x400, scoped, tag = 'input window, operand 2, single buffered']
    #allocation8 [shape = 'u8[200704]{0}', space=vmem, size = 0x31000, scoped, tag = 'input window, operand 3, single buffered']
    #allocation9 [shape = 's32[1]{0}', space=sflag, size = 0x4, scoped, tag = 'scoped memory for tpu_custom_call.1']
    #allocation10 [shape = 'u8[917504]{0}', space=vmem, size = 0xe0000, scoped, tag = 'input window, operand 5, single buffered']
    #allocation11 [shape = 'u8[57344]{0}', space=vmem, size = 0xe000, scoped, tag = 'output window, operand 0, single buffered']
    %11 = vsyncpa [#allocation3], 0
    %12 = vsyncpa [#allocation6], 0
    %13 = vsyncpa [#allocation9], 0
    %14 = vsyncpa [#allocation4], 0
    // Predicated region
    $region2: #{tpu_custom_call.1} parent=1 // pred_check
      _
    $region3: #{tpu_custom_call.1} parent=1 // pred_check_branch
      %16 = sbr.rel (0) target = $region5
    $region4: #{tpu_custom_call.1} parent=1 // pred_region
      %s18 = ssub.s32 256, 256
      %19 = vsyncadd [#allocation3], %s18
      %s20 = sshll.u32 [#allocation2], 4
      %s21 = int_to_ptr.vmem [resolvable:$true] %s20
      %26 = dma.hbm_to_vmem [thread:$0]  %s0, 256, %s21, [#allocation3], 128, 128, 8
    $region5: #{tpu_custom_call.1} parent=1 // pred_fallthru
      _
    // Predicated region
    $region6: #{tpu_custom_call.1} parent=1 // pred_check
      _
    $region7: #{tpu_custom_call.1} parent=1 // pred_check_branch
      %28 = sbr.rel (0) target = $region9
    $region8: #{tpu_custom_call.1} parent=1 // pred_region
      %s30 = ssub.s32 1792, 1792
      %31 = vsyncadd [#allocation6], %s30
      %s32 = sshll.u32 [#allocation5], 4
      %s33 = int_to_ptr.vmem [resolvable:$true] %s32
      %38 = dma.hbm_to_vmem [thread:$0]  %s1, 1792, %s33, [#allocation6], 256, 256, 16
    $region9: #{tpu_custom_call.1} parent=1 // pred_fallthru
      _
    // Predicated region
    $region10: #{tpu_custom_call.1} parent=1 // pred_check
      _
    $region11: #{tpu_custom_call.1} parent=1 // pred_check_branch
      %40 = sbr.rel (0) target = $region13
    $region12: #{tpu_custom_call.1} parent=1 // pred_region
      %s42 = ssub.s32 32, 32
      %43 = vsyncadd [#allocation6], %s42
      %s45 = sshll.u32 [#allocation7], 4
      %s46 = int_to_ptr.vmem [resolvable:$true] %s45
      %48 = dma.hbm_to_vmem [thread:$0]  %s2, 32, %s46, [#allocation6]
    $region13: #{tpu_custom_call.1} parent=1 // pred_fallthru
      _
    // Predicated region
    $region14: #{tpu_custom_call.1} parent=1 // pred_check
      _
    $region15: #{tpu_custom_call.1} parent=1 // pred_check_branch
      %50 = sbr.rel (0) target = $region17
    $region16: #{tpu_custom_call.1} parent=1 // pred_region
      %s52 = ssub.s32 6272, 6272
      %53 = vsyncadd [#allocation9], %s52
      %s54 = sshll.u32 [#allocation8], 4
      %s55 = int_to_ptr.vmem [resolvable:$true] %s54
      %60 = dma.hbm_to_vmem [thread:$0]  %s3, 6272, %s55, [#allocation9], 896, 896, 56
    $region17: #{tpu_custom_call.1} parent=1 // pred_fallthru
      _
    // Predicated region
    $region18: #{tpu_custom_call.1} parent=1 // pred_check
      _
    $region19: #{tpu_custom_call.1} parent=1 // pred_check_branch
      %62 = sbr.rel (0) target = $region21
    $region20: #{tpu_custom_call.1} parent=1 // pred_region
      _
    $region21: #{tpu_custom_call.1} parent=1 // pred_fallthru
      _
    // Predicated region
    $region22: #{tpu_custom_call.1} parent=1 // pred_check
      _
    $region23: #{tpu_custom_call.1} parent=1 // pred_check_branch
      %64 = sbr.rel (0) target = $region25
    $region24: #{tpu_custom_call.1} parent=1 // pred_region
      %s66 = ssub.s32 28672, 28672
      %67 = vsyncadd [#allocation9], %s66
      %s68 = sshll.u32 [#allocation10], 4
      %s69 = int_to_ptr.vmem [resolvable:$true] %s68
      %74 = dma.hbm_to_vmem [thread:$0]  %s5, 28672, %s69, [#allocation9], 896, 896, 56
    $region25: #{tpu_custom_call.1} parent=1 // pred_fallthru
      _
    // Predicated region
    $region26: #{tpu_custom_call.1} parent=1 // pred_check
      _
    $region27: #{tpu_custom_call.1} parent=1 // pred_check_branch
      %76 = sbr.rel (0) target = $region29
    $region28: #{tpu_custom_call.1} parent=1 // pred_region
      %77 = dma.done [#allocation3], 256
    $region29: #{tpu_custom_call.1} parent=1 // pred_fallthru
      _
    // Predicated region
    $region30: #{tpu_custom_call.1} parent=1 // pred_check
      _
    $region31: #{tpu_custom_call.1} parent=1 // pred_check_branch
      %79 = sbr.rel (0) target = $region33
    $region32: #{tpu_custom_call.1} parent=1 // pred_region
      %80 = dma.done [#allocation6], 1792
    $region33: #{tpu_custom_call.1} parent=1 // pred_fallthru
      _
    // Predicated region
    $region34: #{tpu_custom_call.1} parent=1 // pred_check
      _
    $region35: #{tpu_custom_call.1} parent=1 // pred_check_branch
      %82 = sbr.rel (0) target = $region37
    $region36: #{tpu_custom_call.1} parent=1 // pred_region
      %83 = dma.done [#allocation6], 32
    $region37: #{tpu_custom_call.1} parent=1 // pred_fallthru
      _
    // Predicated region
    $region38: #{tpu_custom_call.1} parent=1 // pred_check
      _
    $region39: #{tpu_custom_call.1} parent=1 // pred_check_branch
      %85 = sbr.rel (0) target = $region41
    $region40: #{tpu_custom_call.1} parent=1 // pred_region
      %86 = dma.done [#allocation9], 6272
    $region41: #{tpu_custom_call.1} parent=1 // pred_fallthru
      _
    // Predicated region
    $region42: #{tpu_custom_call.1} parent=1 // pred_check
      _
    $region43: #{tpu_custom_call.1} parent=1 // pred_check_branch
      %88 = sbr.rel (0) target = $region45
    $region44: #{tpu_custom_call.1} parent=1 // pred_region
      %89 = dma.done [#allocation9], 28672
    $region45: #{tpu_custom_call.1} parent=1 // pred_fallthru
      _
    %v90 = vld [vmem:[#allocation2] sm:$0xff]
    %v91 = vld [vmem:[#allocation2 + $0x8] sm:$0xff]
    %v92 = vld [vmem:[#allocation8] sm:$0xff]
    %v93 = vld [vmem:[#allocation8 + $0x8] sm:$0xff]
    %v94 = vld [vmem:[#allocation8 + $0x10] sm:$0xff]
    %v95 = vld [vmem:[#allocation8 + $0x18] sm:$0xff]
    %v96 = vld [vmem:[#allocation8 + $0x20] sm:$0xff]
    %v97 = vld [vmem:[#allocation8 + $0x28] sm:$0xff]
    %v98 = vld [vmem:[#allocation8 + $0x30] sm:$0xff]
    %v99 = vld [vmem:[#allocation8 + $0x38] sm:$0xff]
    %v100 = vld [vmem:[#allocation8 + $0x40] sm:$0xff]
    %v101 = vld [vmem:[#allocation8 + $0x48] sm:$0xff]
    %v102 = vld [vmem:[#allocation8 + $0x50] sm:$0xff]
    %v103 = vld [vmem:[#allocation8 + $0x58] sm:$0xff]
    %v104 = vld [vmem:[#allocation8 + $0x60] sm:$0xff]
    %v105 = vld [vmem:[#allocation8 + $0x68] sm:$0xff]
    %v106 = vld [vmem:[#allocation8 + $0x70] sm:$0xff]
    %v107 = vld [vmem:[#allocation8 + $0x78] sm:$0xff]
    %v108 = vld [vmem:[#allocation8 + $0x80] sm:$0xff]
    %v109 = vld [vmem:[#allocation8 + $0x88] sm:$0xff]
    %v110 = vld [vmem:[#allocation8 + $0x90] sm:$0xff]
    %v111 = vld [vmem:[#allocation8 + $0x98] sm:$0xff]
    %v112 = vld [vmem:[#allocation8 + $0xa0] sm:$0xff]
    %v113 = vld [vmem:[#allocation8 + $0xa8] sm:$0xff]
    %v114 = vld [vmem:[#allocation8 + $0xb0] sm:$0xff]
    %v115 = vld [vmem:[#allocation8 + $0xb8] sm:$0xff]
    %v116 = vld [vmem:[#allocation8 + $0xc0] sm:$0xff]
    %v117 = vld [vmem:[#allocation8 + $0xc8] sm:$0xff]
    %v118 = vld [vmem:[#allocation8 + $0xd0] sm:$0xff]
    %v119 = vld [vmem:[#allocation8 + $0xd8] sm:$0xff]
    %v120 = vld [vmem:[#allocation8 + $0xe0] sm:$0xff]
    %v121 = vld [vmem:[#allocation8 + $0xe8] sm:$0xff]
    %v122 = vld [vmem:[#allocation8 + $0xf0] sm:$0xff]
    %v123 = vld [vmem:[#allocation8 + $0xf8] sm:$0xff]
    %v124 = vld [vmem:[#allocation8 + $0x100] sm:$0xff]
    %v125 = vld [vmem:[#allocation8 + $0x108] sm:$0xff]
    %v126 = vld [vmem:[#allocation8 + $0x110] sm:$0xff]
    %v127 = vld [vmem:[#allocation8 + $0x118] sm:$0xff]
    %v128 = vld [vmem:[#allocation8 + $0x120] sm:$0xff]
    %v129 = vld [vmem:[#allocation8 + $0x128] sm:$0xff]
    %v130 = vld [vmem:[#allocation8 + $0x130] sm:$0xff]
    %v131 = vld [vmem:[#allocation8 + $0x138] sm:$0xff]
    %v132 = vld [vmem:[#allocation8 + $0x140] sm:$0xff]
    %v133 = vld [vmem:[#allocation8 + $0x148] sm:$0xff]
    %v134 = vld [vmem:[#allocation8 + $0x150] sm:$0xff]
    %v135 = vld [vmem:[#allocation8 + $0x158] sm:$0xff]
    %v136 = vld [vmem:[#allocation8 + $0x160] sm:$0xff]
    %v137 = vld [vmem:[#allocation8 + $0x168] sm:$0xff]
    %v138 = vld [vmem:[#allocation8 + $0x170] sm:$0xff]
    %v139 = vld [vmem:[#allocation8 + $0x178] sm:$0xff]
    %v140 = vld [vmem:[#allocation8 + $0x180] sm:$0xff]
    %v141 = vld [vmem:[%s4] sm:$0xff]
    %v143 = vlaneseq
    %v144 = vshrl.u32 %v143, 7
    %v145 = vsub.s32 0, %v144
    %v146 = vrot.slane %v141, %v145
    %v147 = vlaneseq
    %v148 = vshrl.u32 %v147, 7
    %v149 = vsub.s32 1, %v148
    %v150 = vrot.slane %v141, %v149
    %v151 = vlaneseq
    %v152 = vshrl.u32 %v151, 7
    %v153 = vsub.s32 2, %v152
    %v154 = vrot.slane %v141, %v153
    %v155 = vlaneseq
    %v156 = vshrl.u32 %v155, 7
    %v157 = vsub.s32 3, %v156
    %v158 = vrot.slane %v141, %v157
    %v159 = vlaneseq
    %v160 = vshrl.u32 %v159, 7
    %v161 = vsub.s32 4, %v160
    %v162 = vrot.slane %v141, %v161
    %v163 = vlaneseq
    %v164 = vshrl.u32 %v163, 7
    %v165 = vsub.s32 5, %v164
    %v166 = vrot.slane %v141, %v165
    %v167 = vlaneseq
    %v168 = vshrl.u32 %v167, 7
    %v169 = vsub.s32 6, %v168
    %v170 = vrot.slane %v141, %v169
    %vm178 = vcmask 457728
    %v180 = vsel %vm178, %v90, 0
    %v183 = vsel %vm178, %v91, 0
    %185 = vmatprep.subr.mxu0 0.0
    %186 = vmatpush1.msra.mxu0 0.0
    %187 = vmatprep.subr.mxu0 0.0
    %188 = vmatpush1.msra.mxu0 0.0
    %189 = vmatprep.subr.mxu0 0.0
    %190 = vmatpush1.msra.mxu0 0.0
    %191 = vmatprep.subr.mxu0 0.0
    %192 = vmatpush1.msra.mxu0 0.0
    %193 = vmatprep.subr.mxu0 0.0
    %194 = vmatpush1.msra.mxu0 0.0
    %195 = vmatprep.subr.mxu0 0.0
    %196 = vmatpush1.msra.mxu0 0.0
    %197 = vmatprep.subr.mxu0 0.0
    %198 = vmatpush1.msra.mxu0 0.0
    %199 = vmatprep.subr.mxu0 0.0
    %200 = vmatpush1.msra.mxu0 0.0
    %201 = vmatprep.subr.mxu0 0.0
    %202 = vmatpush1.msra.mxu0 0.0
    %203 = vmatprep.subr.mxu0 %v135
    %204 = vmatpush1.msra.mxu0 %v134
    %205 = vmatprep.subr.mxu0 %v128
    %206 = vmatpush1.msra.mxu0 %v127
    %207 = vmatprep.subr.mxu0 %v121
    %208 = vmatpush1.msra.mxu0 %v120
    %209 = vmatprep.subr.mxu0 %v114
    %210 = vmatpush1.msra.mxu0 %v113
    %211 = vmatprep.subr.mxu0 %v107
    %212 = vmatpush1.msra.mxu0 %v106
    %213 = vmatprep.subr.mxu0 %v100
    %214 = vmatpush1.msra.mxu0 %v99
    %215 = vmatprep.subr.mxu0 %v93
    %216 = vmatpush1.msra.mxu0 %v92
    %217 = vmatprep.subr.mxu0 0.0
    %218 = vmatpush2.msra.mxu0 0.0
    %219 = vmatprep.subr.mxu0 0.0
    %220 = vmatpush2.msra.mxu0 0.0
    %221 = vmatprep.subr.mxu0 0.0
    %222 = vmatpush2.msra.mxu0 0.0
    %223 = vmatprep.subr.mxu0 0.0
    %224 = vmatpush2.msra.mxu0 0.0
    %225 = vmatprep.subr.mxu0 0.0
    %226 = vmatpush2.msra.mxu0 0.0
    %227 = vmatprep.subr.mxu0 0.0
    %228 = vmatpush2.msra.mxu0 0.0
    %229 = vmatprep.subr.mxu0 0.0
    %230 = vmatpush2.msra.mxu0 0.0
    %231 = vmatprep.subr.mxu0 0.0
    %232 = vmatpush2.msra.mxu0 0.0
    %233 = vmatprep.subr.mxu0 0.0
    %234 = vmatpush2.msra.mxu0 0.0
    %235 = vmatprep.subr.mxu0 0.0
    %236 = vmatpush2.msra.mxu0 0.0
    %237 = vmatprep.subr.mxu0 0.0
    %238 = vmatpush2.msra.mxu0 0.0
    %239 = vmatprep.subr.mxu0 0.0
    %240 = vmatpush2.msra.mxu0 0.0
    %241 = vmatprep.subr.mxu0 0.0
    %242 = vmatpush2.msra.mxu0 0.0
    %243 = vmatprep.subr.mxu0 0.0
    %244 = vmatpush2.msra.mxu0 0.0
    %245 = vmatprep.subr.mxu0 0.0
    %246 = vmatpush2.msra.mxu0 0.0
    %247 = vmatprep.subr.mxu0 0.0
    %248 = vmatpush2.msra.mxu0 0.0
    %249 = vmatprep.mubr.f32.mxu0 0.0
    %250 = vmatmul.mubr.f32.gmra.mxu0 %v180
    %v251 = vpop.f32.mrf.mxu0
    %v252 = vadd.f32 %v146, %v251
    %v253 = vpop.f32.mrf.mxu0
    %v254 = vadd.f32 %v150, %v253
    %255 = vmatprep.mubr.f32.mxu0 0.0
    %256 = vmatmul.mubr.f32.gmra.mxu0 %v183
    %v257 = vpop.f32.mrf.mxu0
    %v258 = vadd.f32 %v146, %v257
    %v259 = vpop.f32.mrf.mxu0
    %v260 = vadd.f32 %v150, %v259
    %261 = vdwg.mxu0
    %262 = vmatprep.subr.mxu0 0.0
    %263 = vmatpush1.msra.mxu0 0.0
    %264 = vmatprep.subr.mxu0 0.0
    %265 = vmatpush1.msra.mxu0 0.0
    %266 = vmatprep.subr.mxu0 0.0
    %267 = vmatpush1.msra.mxu0 0.0
    %268 = vmatprep.subr.mxu0 0.0
    %269 = vmatpush1.msra.mxu0 0.0
    %270 = vmatprep.subr.mxu0 0.0
    %271 = vmatpush1.msra.mxu0 0.0
    %272 = vmatprep.subr.mxu0 0.0
    %273 = vmatpush1.msra.mxu0 0.0
    %274 = vmatprep.subr.mxu0 0.0
    %275 = vmatpush1.msra.mxu0 0.0
    %276 = vmatprep.subr.mxu0 0.0
    %277 = vmatpush1.msra.mxu0 0.0
    %278 = vmatprep.subr.mxu0 0.0
    %279 = vmatpush1.msra.mxu0 0.0
    %280 = vmatprep.subr.mxu0 %v137
    %281 = vmatpush1.msra.mxu0 %v136
    %282 = vmatprep.subr.mxu0 %v130
    %283 = vmatpush1.msra.mxu0 %v129
    %284 = vmatprep.subr.mxu0 %v123
    %285 = vmatpush1.msra.mxu0 %v122
    %286 = vmatprep.subr.mxu0 %v116
    %287 = vmatpush1.msra.mxu0 %v115
    %288 = vmatprep.subr.mxu0 %v109
    %289 = vmatpush1.msra.mxu0 %v108
    %290 = vmatprep.subr.mxu0 %v102
    %291 = vmatpush1.msra.mxu0 %v101
    %292 = vmatprep.subr.mxu0 %v95
    %293 = vmatpush1.msra.mxu0 %v94
    %294 = vmatprep.subr.mxu0 0.0
    %295 = vmatpush2.msra.mxu0 0.0
    %296 = vmatprep.subr.mxu0 0.0
    %297 = vmatpush2.msra.mxu0 0.0
    %298 = vmatprep.subr.mxu0 0.0
    %299 = vmatpush2.msra.mxu0 0.0
    %300 = vmatprep.subr.mxu0 0.0
    %301 = vmatpush2.msra.mxu0 0.0
    %302 = vmatprep.subr.mxu0 0.0
    %303 = vmatpush2.msra.mxu0 0.0
    %304 = vmatprep.subr.mxu0 0.0
    %305 = vmatpush2.msra.mxu0 0.0
    %306 = vmatprep.subr.mxu0 0.0
    %307 = vmatpush2.msra.mxu0 0.0
    %308 = vmatprep.subr.mxu0 0.0
    %309 = vmatpush2.msra.mxu0 0.0
    %310 = vmatprep.subr.mxu0 0.0
    %311 = vmatpush2.msra.mxu0 0.0
    %312 = vmatprep.subr.mxu0 0.0
    %313 = vmatpush2.msra.mxu0 0.0
    %314 = vmatprep.subr.mxu0 0.0
    %315 = vmatpush2.msra.mxu0 0.0
    %316 = vmatprep.subr.mxu0 0.0
    %317 = vmatpush2.msra.mxu0 0.0
    %318 = vmatprep.subr.mxu0 0.0
    %319 = vmatpush2.msra.mxu0 0.0
    %320 = vmatprep.subr.mxu0 0.0
    %321 = vmatpush2.msra.mxu0 0.0
    %322 = vmatprep.subr.mxu0 0.0
    %323 = vmatpush2.msra.mxu0 0.0
    %324 = vmatprep.subr.mxu0 0.0
    %325 = vmatpush2.msra.mxu0 0.0
    %326 = vmatprep.mubr.f32.mxu0 0.0
    %327 = vmatmul.mubr.f32.gmra.mxu0 %v180
    %v328 = vpop.f32.mrf.mxu0
    %v329 = vadd.f32 %v154, %v328
    %v330 = vpop.f32.mrf.mxu0
    %v331 = vadd.f32 %v158, %v330
    %332 = vmatprep.mubr.f32.mxu0 0.0
    %333 = vmatmul.mubr.f32.gmra.mxu0 %v183
    %v334 = vpop.f32.mrf.mxu0
    %v335 = vadd.f32 %v154, %v334
    %v336 = vpop.f32.mrf.mxu0
    %v337 = vadd.f32 %v158, %v336
    %338 = vdwg.mxu0
    %339 = vmatprep.subr.mxu0 0.0
    %340 = vmatpush1.msra.mxu0 0.0
    %341 = vmatprep.subr.mxu0 0.0
    %342 = vmatpush1.msra.mxu0 0.0
    %343 = vmatprep.subr.mxu0 0.0
    %344 = vmatpush1.msra.mxu0 0.0
    %345 = vmatprep.subr.mxu0 0.0
    %346 = vmatpush1.msra.mxu0 0.0
    %347 = vmatprep.subr.mxu0 0.0
    %348 = vmatpush1.msra.mxu0 0.0
    %349 = vmatprep.subr.mxu0 0.0
    %350 = vmatpush1.msra.mxu0 0.0
    %351 = vmatprep.subr.mxu0 0.0
    %352 = vmatpush1.msra.mxu0 0.0
    %353 = vmatprep.subr.mxu0 0.0
    %354 = vmatpush1.msra.mxu0 0.0
    %355 = vmatprep.subr.mxu0 0.0
    %356 = vmatpush1.msra.mxu0 0.0
    %357 = vmatprep.subr.mxu0 %v139
    %358 = vmatpush1.msra.mxu0 %v138
    %359 = vmatprep.subr.mxu0 %v132
    %360 = vmatpush1.msra.mxu0 %v131
    %361 = vmatprep.subr.mxu0 %v125
    %362 = vmatpush1.msra.mxu0 %v124
    %363 = vmatprep.subr.mxu0 %v118
    %364 = vmatpush1.msra.mxu0 %v117
    %365 = vmatprep.subr.mxu0 %v111
    %366 = vmatpush1.msra.mxu0 %v110
    %367 = vmatprep.subr.mxu0 %v104
    %368 = vmatpush1.msra.mxu0 %v103
    %369 = vmatprep.subr.mxu0 %v97
    %370 = vmatpush1.msra.mxu0 %v96
    %371 = vmatprep.subr.mxu0 0.0
    %372 = vmatpush2.msra.mxu0 0.0
    %373 = vmatprep.subr.mxu0 0.0
    %374 = vmatpush2.msra.mxu0 0.0
    %375 = vmatprep.subr.mxu0 0.0
    %376 = vmatpush2.msra.mxu0 0.0
    %377 = vmatprep.subr.mxu0 0.0
    %378 = vmatpush2.msra.mxu0 0.0
    %379 = vmatprep.subr.mxu0 0.0
    %380 = vmatpush2.msra.mxu0 0.0
    %381 = vmatprep.subr.mxu0 0.0
    %382 = vmatpush2.msra.mxu0 0.0
    %383 = vmatprep.subr.mxu0 0.0
    %384 = vmatpush2.msra.mxu0 0.0
    %385 = vmatprep.subr.mxu0 0.0
    %386 = vmatpush2.msra.mxu0 0.0
    %387 = vmatprep.subr.mxu0 0.0
    %388 = vmatpush2.msra.mxu0 0.0
    %389 = vmatprep.subr.mxu0 0.0
    %390 = vmatpush2.msra.mxu0 0.0
    %391 = vmatprep.subr.mxu0 0.0
    %392 = vmatpush2.msra.mxu0 0.0
    %393 = vmatprep.subr.mxu0 0.0
    %394 = vmatpush2.msra.mxu0 0.0
    %395 = vmatprep.subr.mxu0 0.0
    %396 = vmatpush2.msra.mxu0 0.0
    %397 = vmatprep.subr.mxu0 0.0
    %398 = vmatpush2.msra.mxu0 0.0
    %399 = vmatprep.subr.mxu0 0.0
    %400 = vmatpush2.msra.mxu0 0.0
    %401 = vmatprep.subr.mxu0 0.0
    %402 = vmatpush2.msra.mxu0 0.0
    %403 = vmatprep.mubr.f32.mxu0 0.0
    %404 = vmatmul.mubr.f32.gmra.mxu0 %v180
    %v405 = vpop.f32.mrf.mxu0
    %v406 = vadd.f32 %v162, %v405
    %v407 = vpop.f32.mrf.mxu0
    %v408 = vadd.f32 %v166, %v407
    %409 = vmatprep.mubr.f32.mxu0 0.0
    %410 = vmatmul.mubr.f32.gmra.mxu0 %v183
    %v411 = vpop.f32.mrf.mxu0
    %v412 = vadd.f32 %v162, %v411
    %v413 = vpop.f32.mrf.mxu0
    %v414 = vadd.f32 %v166, %v413
    %415 = vdwg.mxu0
    %416 = vmatprep.subr.mxu0 0.0
    %417 = vmatpush1.msra.mxu0 0.0
    %418 = vmatprep.subr.mxu0 0.0
    %419 = vmatpush1.msra.mxu0 0.0
    %420 = vmatprep.subr.mxu0 0.0
    %421 = vmatpush1.msra.mxu0 0.0
    %422 = vmatprep.subr.mxu0 0.0
    %423 = vmatpush1.msra.mxu0 0.0
    %424 = vmatprep.subr.mxu0 0.0
    %425 = vmatpush1.msra.mxu0 0.0
    %426 = vmatprep.subr.mxu0 0.0
    %427 = vmatpush1.msra.mxu0 0.0
    %428 = vmatprep.subr.mxu0 0.0
    %429 = vmatpush1.msra.mxu0 0.0
    %430 = vmatprep.subr.mxu0 0.0
    %431 = vmatpush1.msra.mxu0 0.0
    %432 = vmatprep.subr.mxu0 0.0
    %433 = vmatpush1.msra.mxu0 0.0
    %434 = vmatprep.subr.mxu0 0.0
    %435 = vmatpush1.msra.mxu0 %v140
    %436 = vmatprep.subr.mxu0 0.0
    %437 = vmatpush1.msra.mxu0 %v133
    %438 = vmatprep.subr.mxu0 0.0
    %439 = vmatpush1.msra.mxu0 %v126
    %440 = vmatprep.subr.mxu0 0.0
    %441 = vmatpush1.msra.mxu0 %v119
    %442 = vmatprep.subr.mxu0 0.0
    %443 = vmatpush1.msra.mxu0 %v112
    %444 = vmatprep.subr.mxu0 0.0
    %445 = vmatpush1.msra.mxu0 %v105
    %446 = vmatprep.subr.mxu0 0.0
    %447 = vmatpush1.msra.mxu0 %v98
    %448 = vmatprep.subr.mxu0 0.0
    %449 = vmatpush2.msra.mxu0 0.0
    %450 = vmatprep.subr.mxu0 0.0
    %451 = vmatpush2.msra.mxu0 0.0
    %452 = vmatprep.subr.mxu0 0.0
    %453 = vmatpush2.msra.mxu0 0.0
    %454 = vmatprep.subr.mxu0 0.0
    %455 = vmatpush2.msra.mxu0 0.0
    %456 = vmatprep.subr.mxu0 0.0
    %457 = vmatpush2.msra.mxu0 0.0
    %458 = vmatprep.subr.mxu0 0.0
    %459 = vmatpush2.msra.mxu0 0.0
    %460 = vmatprep.subr.mxu0 0.0
    %461 = vmatpush2.msra.mxu0 0.0
    %462 = vmatprep.subr.mxu0 0.0
    %463 = vmatpush2.msra.mxu0 0.0
    %464 = vmatprep.subr.mxu0 0.0
    %465 = vmatpush2.msra.mxu0 0.0
    %466 = vmatprep.subr.mxu0 0.0
    %467 = vmatpush2.msra.mxu0 0.0
    %468 = vmatprep.subr.mxu0 0.0
    %469 = vmatpush2.msra.mxu0 0.0
    %470 = vmatprep.subr.mxu0 0.0
    %471 = vmatpush2.msra.mxu0 0.0
    %472 = vmatprep.subr.mxu0 0.0
    %473 = vmatpush2.msra.mxu0 0.0
    %474 = vmatprep.subr.mxu0 0.0
    %475 = vmatpush2.msra.mxu0 0.0
    %476 = vmatprep.subr.mxu0 0.0
    %477 = vmatpush2.msra.mxu0 0.0
    %478 = vmatprep.subr.mxu0 0.0
    %479 = vmatpush2.msra.mxu0 0.0
    %480 = vmatprep.mubr.f32.mxu0 0.0
    %481 = vmatmul.mubr.f32.gmra.mxu0 %v180
    %v482 = vpop.f32.mrf.mxu0
    %v483 = vadd.f32 %v170, %v482
    %v484 = vpop.f32.mrf.mxu0
    %485 = vmatprep.mubr.f32.mxu0 0.0
    %486 = vmatmul.mubr.f32.gmra.mxu0 %v183
    %v487 = vpop.f32.mrf.mxu0
    %v488 = vadd.f32 %v170, %v487
    %v489 = vpop.f32.mrf.mxu0
    %490 = vdwg.mxu0
    %v491 = vld [vmem:[#allocation5] sm:$0xff]
    %v492 = vld [vmem:[#allocation5 + $0x8] sm:$0xff]
    %v493 = vld [vmem:[#allocation5 + $0x10] sm:$0xff]
    %v494 = vld [vmem:[#allocation5 + $0x18] sm:$0xff]
    %v495 = vld [vmem:[#allocation5 + $0x20] sm:$0xff]
    %v496 = vld [vmem:[#allocation5 + $0x28] sm:$0xff]
    %v497 = vld [vmem:[#allocation5 + $0x30] sm:$0xff]
    %v498 = vld [vmem:[#allocation5 + $0x38] sm:$0xff]
    %v499 = vld [vmem:[#allocation5 + $0x40] sm:$0xff]
    %v500 = vld [vmem:[#allocation5 + $0x48] sm:$0xff]
    %v501 = vld [vmem:[#allocation5 + $0x50] sm:$0xff]
    %v502 = vld [vmem:[#allocation5 + $0x58] sm:$0xff]
    %v503 = vld [vmem:[#allocation5 + $0x60] sm:$0xff]
    %v504 = vld [vmem:[#allocation5 + $0x68] sm:$0xff]
    %505 = vmatprep.subr.mxu0 0.0
    %506 = vmatpush1.msra.mxu0 0.0
    %507 = vmatprep.subr.mxu0 0.0
    %508 = vmatpush1.msra.mxu0 0.0
    %509 = vmatprep.subr.mxu0 0.0
    %510 = vmatpush1.msra.mxu0 0.0
    %511 = vmatprep.subr.mxu0 0.0
    %512 = vmatpush1.msra.mxu0 0.0
    %513 = vmatprep.subr.mxu0 0.0
    %514 = vmatpush1.msra.mxu0 0.0
    %515 = vmatprep.subr.mxu0 0.0
    %516 = vmatpush1.msra.mxu0 0.0
    %517 = vmatprep.subr.mxu0 0.0
    %518 = vmatpush1.msra.mxu0 0.0
    %519 = vmatprep.subr.mxu0 0.0
    %520 = vmatpush1.msra.mxu0 0.0
    %521 = vmatprep.subr.mxu0 0.0
    %522 = vmatpush1.msra.mxu0 0.0
    %523 = vmatprep.subr.mxu0 %v504
    %524 = vmatpush1.msra.mxu0 %v503
    %525 = vmatprep.subr.mxu0 %v502
    %526 = vmatpush1.msra.mxu0 %v501
    %527 = vmatprep.subr.mxu0 %v500
    %528 = vmatpush1.msra.mxu0 %v499
    %529 = vmatprep.subr.mxu0 %v498
    %530 = vmatpush1.msra.mxu0 %v497
    %531 = vmatprep.subr.mxu0 %v496
    %532 = vmatpush1.msra.mxu0 %v495
    %533 = vmatprep.subr.mxu0 %v494
    %534 = vmatpush1.msra.mxu0 %v493
    %535 = vmatprep.subr.mxu0 %v492
    %536 = vmatpush1.msra.mxu0 %v491
    %537 = vmatprep.subr.mxu0 0.0
    %538 = vmatpush2.msra.mxu0 0.0
    %539 = vmatprep.subr.mxu0 0.0
    %540 = vmatpush2.msra.mxu0 0.0
    %541 = vmatprep.subr.mxu0 0.0
    %542 = vmatpush2.msra.mxu0 0.0
    %543 = vmatprep.subr.mxu0 0.0
    %544 = vmatpush2.msra.mxu0 0.0
    %545 = vmatprep.subr.mxu0 0.0
    %546 = vmatpush2.msra.mxu0 0.0
    %547 = vmatprep.subr.mxu0 0.0
    %548 = vmatpush2.msra.mxu0 0.0
    %549 = vmatprep.subr.mxu0 0.0
    %550 = vmatpush2.msra.mxu0 0.0
    %551 = vmatprep.subr.mxu0 0.0
    %552 = vmatpush2.msra.mxu0 0.0
    %553 = vmatprep.subr.mxu0 0.0
    %554 = vmatpush2.msra.mxu0 0.0
    %555 = vmatprep.subr.mxu0 0.0
    %556 = vmatpush2.msra.mxu0 0.0
    %557 = vmatprep.subr.mxu0 0.0
    %558 = vmatpush2.msra.mxu0 0.0
    %559 = vmatprep.subr.mxu0 0.0
    %560 = vmatpush2.msra.mxu0 0.0
    %561 = vmatprep.subr.mxu0 0.0
    %562 = vmatpush2.msra.mxu0 0.0
    %563 = vmatprep.subr.mxu0 0.0
    %564 = vmatpush2.msra.mxu0 0.0
    %565 = vmatprep.subr.mxu0 0.0
    %566 = vmatpush2.msra.mxu0 0.0
    %567 = vmatprep.subr.mxu0 0.0
    %568 = vmatpush2.msra.mxu0 0.0
    %569 = vmatprep.mubr.f32.mxu0 0.0
    %570 = vmatmul.mubr.f32.gmra.mxu0 %v180
    %v571 = vpop.f32.mrf.mxu0
    %v572 = vadd.f32 0.0, %v571
    %v573 = vpop.f32.mrf.mxu0
    %v574 = vadd.f32 0.0, %v573
    %575 = vmatprep.mubr.f32.mxu0 0.0
    %576 = vmatmul.mubr.f32.gmra.mxu0 %v183
    %v577 = vpop.f32.mrf.mxu0
    %v578 = vadd.f32 0.0, %v577
    %v579 = vpop.f32.mrf.mxu0
    %v580 = vadd.f32 0.0, %v579
    %581 = vdwg.mxu0
    %v582 = vld [vmem:[#allocation7] sm:$0x3]
    %v584 = vlaneseq
    %v585 = vshrl.u32 %v584, 7
    %v586 = vsub.s32 0, %v585
    %v587 = vrot.slane %v582, %v586
    %v588 = vlaneseq
    %v589 = vshrl.u32 %v588, 7
    %v590 = vsub.s32 1, %v589
    %v591 = vrot.slane %v582, %v590
    %v594 = vsub.f32 %v572, %v587
    %v595 = vsub.f32 %v574, %v591
    %v596 = vsub.f32 %v578, %v587
    %v597 = vsub.f32 %v580, %v591
    %v598 = vand.u32 2147483647, %v594
    %v599 = vand.u32 2147483647, %v595
    %v600 = vand.u32 2147483647, %v596
    %v601 = vand.u32 2147483647, %v597
    %vm602 = vcmp.lt.f32.partialorder %v598, 0.5
    %vm603 = vcmp.lt.f32.partialorder %v599, 0.5
    %vm604 = vcmp.lt.f32.partialorder %v600, 0.5
    %vm605 = vcmp.lt.f32.partialorder %v601, 0.5
    %v606 = vsel %vm602, 1, 0
    %v607 = vsel %vm603, 1, 0
    %v608 = vsel %vm604, 1, 0
    %v609 = vsel %vm605, 1, 0
    %v610 = vcvt.s32.f32 %v606
    %v611 = vcvt.s32.f32 %v607
    %v612 = vcvt.s32.f32 %v608
    %v613 = vcvt.s32.f32 %v609
    %v614 = vld [vmem:[#allocation10] sm:$0xff]
    %v615 = vld [vmem:[#allocation10 + $0x8] sm:$0xff]
    %v616 = vld [vmem:[#allocation10 + $0x10] sm:$0xff]
    %v617 = vld [vmem:[#allocation10 + $0x18] sm:$0xff]
    %v618 = vld [vmem:[#allocation10 + $0x20] sm:$0xff]
    %v619 = vld [vmem:[#allocation10 + $0x28] sm:$0xff]
    %v620 = vld [vmem:[#allocation10 + $0x30] sm:$0xff]
    %v621 = vld [vmem:[#allocation10 + $0x38] sm:$0xff]
    %v622 = vld [vmem:[#allocation10 + $0x40] sm:$0xff]
    %v623 = vld [vmem:[#allocation10 + $0x48] sm:$0xff]
    %v624 = vld [vmem:[#allocation10 + $0x50] sm:$0xff]
    %v625 = vld [vmem:[#allocation10 + $0x58] sm:$0xff]
    %v626 = vld [vmem:[#allocation10 + $0x60] sm:$0xff]
    %v627 = vld [vmem:[#allocation10 + $0x68] sm:$0xff]
    %v628 = vld [vmem:[#allocation10 + $0x70] sm:$0xff]
    %v629 = vld [vmem:[#allocation10 + $0x78] sm:$0xff]
    %v630 = vld [vmem:[#allocation10 + $0x80] sm:$0xff]
    %v631 = vld [vmem:[#allocation10 + $0x88] sm:$0xff]
    %v632 = vld [vmem:[#allocation10 + $0x90] sm:$0xff]
    %v633 = vld [vmem:[#allocation10 + $0x98] sm:$0xff]
    %v634 = vld [vmem:[#allocation10 + $0xa0] sm:$0xff]
    %v635 = vld [vmem:[#allocation10 + $0xa8] sm:$0xff]
    %v636 = vld [vmem:[#allocation10 + $0xb0] sm:$0xff]
    %v637 = vld [vmem:[#allocation10 + $0xb8] sm:$0xff]
    %v638 = vld [vmem:[#allocation10 + $0xc0] sm:$0xff]
    %v639 = vld [vmem:[#allocation10 + $0xc8] sm:$0xff]
    %v640 = vld [vmem:[#allocation10 + $0xd0] sm:$0xff]
    %v641 = vld [vmem:[#allocation10 + $0xd8] sm:$0xff]
    %v642 = vld [vmem:[#allocation10 + $0xe0] sm:$0xff]
    %v643 = vld [vmem:[#allocation10 + $0xe8] sm:$0xff]
    %v644 = vld [vmem:[#allocation10 + $0xf0] sm:$0xff]
    %v645 = vld [vmem:[#allocation10 + $0xf8] sm:$0xff]
    %v646 = vld [vmem:[#allocation10 + $0x100] sm:$0xff]
    %v647 = vld [vmem:[#allocation10 + $0x108] sm:$0xff]
    %v648 = vld [vmem:[#allocation10 + $0x110] sm:$0xff]
    %v649 = vld [vmem:[#allocation10 + $0x118] sm:$0xff]
    %v650 = vld [vmem:[#allocation10 + $0x120] sm:$0xff]
    %v651 = vld [vmem:[#allocation10 + $0x128] sm:$0xff]
    %v652 = vld [vmem:[#allocation10 + $0x130] sm:$0xff]
    %v653 = vld [vmem:[#allocation10 + $0x138] sm:$0xff]
    %v654 = vld [vmem:[#allocation10 + $0x140] sm:$0xff]
    %v655 = vld [vmem:[#allocation10 + $0x148] sm:$0xff]
    %v656 = vld [vmem:[#allocation10 + $0x150] sm:$0xff]
    %v657 = vld [vmem:[#allocation10 + $0x158] sm:$0xff]
    %v658 = vld [vmem:[#allocation10 + $0x160] sm:$0xff]
    %v659 = vld [vmem:[#allocation10 + $0x168] sm:$0xff]
    %v660 = vld [vmem:[#allocation10 + $0x170] sm:$0xff]
    %v661 = vld [vmem:[#allocation10 + $0x178] sm:$0xff]
    %v662 = vld [vmem:[#allocation10 + $0x180] sm:$0xff]
    %v663 = vld [vmem:[#allocation10 + $0x188] sm:$0xff]
    %v664 = vld [vmem:[#allocation10 + $0x190] sm:$0xff]
    %v665 = vld [vmem:[#allocation10 + $0x198] sm:$0xff]
    %v666 = vld [vmem:[#allocation10 + $0x1a0] sm:$0xff]
    %v667 = vld [vmem:[#allocation10 + $0x1a8] sm:$0xff]
    %v668 = vld [vmem:[#allocation10 + $0x1b0] sm:$0xff]
    %v669 = vld [vmem:[#allocation10 + $0x1b8] sm:$0xff]
    %v670 = vld [vmem:[#allocation10 + $0x1c0] sm:$0xff]
    %v671 = vld [vmem:[#allocation10 + $0x1c8] sm:$0xff]
    %v672 = vld [vmem:[#allocation10 + $0x1d0] sm:$0xff]
    %v673 = vld [vmem:[#allocation10 + $0x1d8] sm:$0xff]
    %v674 = vld [vmem:[#allocation10 + $0x1e0] sm:$0xff]
    %v675 = vld [vmem:[#allocation10 + $0x1e8] sm:$0xff]
    %v676 = vld [vmem:[#allocation10 + $0x1f0] sm:$0xff]
    %v677 = vld [vmem:[#allocation10 + $0x1f8] sm:$0xff]
    %v678 = vld [vmem:[#allocation10 + $0x200] sm:$0xff]
    %v679 = vld [vmem:[#allocation10 + $0x208] sm:$0xff]
    %v680 = vld [vmem:[#allocation10 + $0x210] sm:$0xff]
    %v681 = vld [vmem:[#allocation10 + $0x218] sm:$0xff]
    %v682 = vld [vmem:[#allocation10 + $0x220] sm:$0xff]
    %v683 = vld [vmem:[#allocation10 + $0x228] sm:$0xff]
    %v684 = vld [vmem:[#allocation10 + $0x230] sm:$0xff]
    %v685 = vld [vmem:[#allocation10 + $0x238] sm:$0xff]
    %v686 = vld [vmem:[#allocation10 + $0x240] sm:$0xff]
    %v687 = vld [vmem:[#allocation10 + $0x248] sm:$0xff]
    %v688 = vld [vmem:[#allocation10 + $0x250] sm:$0xff]
    %v689 = vld [vmem:[#allocation10 + $0x258] sm:$0xff]
    %v690 = vld [vmem:[#allocation10 + $0x260] sm:$0xff]
    %v691 = vld [vmem:[#allocation10 + $0x268] sm:$0xff]
    %v692 = vld [vmem:[#allocation10 + $0x270] sm:$0xff]
    %v693 = vld [vmem:[#allocation10 + $0x278] sm:$0xff]
    %v694 = vld [vmem:[#allocation10 + $0x280] sm:$0xff]
    %v695 = vld [vmem:[#allocation10 + $0x288] sm:$0xff]
    %v696 = vld [vmem:[#allocation10 + $0x290] sm:$0xff]
    %v697 = vld [vmem:[#allocation10 + $0x298] sm:$0xff]
    %v698 = vld [vmem:[#allocation10 + $0x2a0] sm:$0xff]
    %v699 = vld [vmem:[#allocation10 + $0x2a8] sm:$0xff]
    %v700 = vld [vmem:[#allocation10 + $0x2b0] sm:$0xff]
    %v701 = vld [vmem:[#allocation10 + $0x2b8] sm:$0xff]
    %v702 = vld [vmem:[#allocation10 + $0x2c0] sm:$0xff]
    %v703 = vld [vmem:[#allocation10 + $0x2c8] sm:$0xff]
    %v704 = vld [vmem:[#allocation10 + $0x2d0] sm:$0xff]
    %v705 = vld [vmem:[#allocation10 + $0x2d8] sm:$0xff]
    %v706 = vld [vmem:[#allocation10 + $0x2e0] sm:$0xff]
    %v707 = vld [vmem:[#allocation10 + $0x2e8] sm:$0xff]
    %v708 = vld [vmem:[#allocation10 + $0x2f0] sm:$0xff]
    %v709 = vld [vmem:[#allocation10 + $0x2f8] sm:$0xff]
    %v710 = vld [vmem:[#allocation10 + $0x300] sm:$0xff]
    %v711 = vld [vmem:[#allocation10 + $0x308] sm:$0xff]
    %v712 = vld [vmem:[#allocation10 + $0x310] sm:$0xff]
    %v713 = vld [vmem:[#allocation10 + $0x318] sm:$0xff]
    %v714 = vld [vmem:[#allocation10 + $0x320] sm:$0xff]
    %v715 = vld [vmem:[#allocation10 + $0x328] sm:$0xff]
    %v716 = vld [vmem:[#allocation10 + $0x330] sm:$0xff]
    %v717 = vld [vmem:[#allocation10 + $0x338] sm:$0xff]
    %v718 = vld [vmem:[#allocation10 + $0x340] sm:$0xff]
    %v719 = vld [vmem:[#allocation10 + $0x348] sm:$0xff]
    %v720 = vld [vmem:[#allocation10 + $0x350] sm:$0xff]
    %v721 = vld [vmem:[#allocation10 + $0x358] sm:$0xff]
    %v722 = vld [vmem:[#allocation10 + $0x360] sm:$0xff]
    %v723 = vld [vmem:[#allocation10 + $0x368] sm:$0xff]
    %v724 = vld [vmem:[#allocation10 + $0x370] sm:$0xff]
    %v725 = vld [vmem:[#allocation10 + $0x378] sm:$0xff]
    %v726 = vld [vmem:[#allocation10 + $0x380] sm:$0xff]
    %v727 = vld [vmem:[#allocation10 + $0x388] sm:$0xff]
    %v728 = vld [vmem:[#allocation10 + $0x390] sm:$0xff]
    %v729 = vld [vmem:[#allocation10 + $0x398] sm:$0xff]
    %v730 = vld [vmem:[#allocation10 + $0x3a0] sm:$0xff]
    %v731 = vld [vmem:[#allocation10 + $0x3a8] sm:$0xff]
    %v732 = vld [vmem:[#allocation10 + $0x3b0] sm:$0xff]
    %v733 = vld [vmem:[#allocation10 + $0x3b8] sm:$0xff]
    %v734 = vld [vmem:[#allocation10 + $0x3c0] sm:$0xff]
    %v735 = vld [vmem:[#allocation10 + $0x3c8] sm:$0xff]
    %v736 = vld [vmem:[#allocation10 + $0x3d0] sm:$0xff]
    %v737 = vld [vmem:[#allocation10 + $0x3d8] sm:$0xff]
    %v738 = vld [vmem:[#allocation10 + $0x3e0] sm:$0xff]
    %v739 = vld [vmem:[#allocation10 + $0x3e8] sm:$0xff]
    %v740 = vld [vmem:[#allocation10 + $0x3f0] sm:$0xff]
    %v741 = vld [vmem:[#allocation10 + $0x3f8] sm:$0xff]
    %v742 = vld [vmem:[#allocation10 + $0x400] sm:$0xff]
    %v743 = vld [vmem:[#allocation10 + $0x408] sm:$0xff]
    %v744 = vld [vmem:[#allocation10 + $0x410] sm:$0xff]
    %v745 = vld [vmem:[#allocation10 + $0x418] sm:$0xff]
    %v746 = vld [vmem:[#allocation10 + $0x420] sm:$0xff]
    %v747 = vld [vmem:[#allocation10 + $0x428] sm:$0xff]
    %v748 = vld [vmem:[#allocation10 + $0x430] sm:$0xff]
    %v749 = vld [vmem:[#allocation10 + $0x438] sm:$0xff]
    %v750 = vld [vmem:[#allocation10 + $0x440] sm:$0xff]
    %v751 = vld [vmem:[#allocation10 + $0x448] sm:$0xff]
    %v752 = vld [vmem:[#allocation10 + $0x450] sm:$0xff]
    %v753 = vld [vmem:[#allocation10 + $0x458] sm:$0xff]
    %v754 = vld [vmem:[#allocation10 + $0x460] sm:$0xff]
    %v755 = vld [vmem:[#allocation10 + $0x468] sm:$0xff]
    %v756 = vld [vmem:[#allocation10 + $0x470] sm:$0xff]
    %v757 = vld [vmem:[#allocation10 + $0x478] sm:$0xff]
    %v758 = vld [vmem:[#allocation10 + $0x480] sm:$0xff]
    %v759 = vld [vmem:[#allocation10 + $0x488] sm:$0xff]
    %v760 = vld [vmem:[#allocation10 + $0x490] sm:$0xff]
    %v761 = vld [vmem:[#allocation10 + $0x498] sm:$0xff]
    %v762 = vld [vmem:[#allocation10 + $0x4a0] sm:$0xff]
    %v763 = vld [vmem:[#allocation10 + $0x4a8] sm:$0xff]
    %v764 = vld [vmem:[#allocation10 + $0x4b0] sm:$0xff]
    %v765 = vld [vmem:[#allocation10 + $0x4b8] sm:$0xff]
    %v766 = vld [vmem:[#allocation10 + $0x4c0] sm:$0xff]
    %v767 = vld [vmem:[#allocation10 + $0x4c8] sm:$0xff]
    %v768 = vld [vmem:[#allocation10 + $0x4d0] sm:$0xff]
    %v769 = vld [vmem:[#allocation10 + $0x4d8] sm:$0xff]
    %v770 = vld [vmem:[#allocation10 + $0x4e0] sm:$0xff]
    %v771 = vld [vmem:[#allocation10 + $0x4e8] sm:$0xff]
    %v772 = vld [vmem:[#allocation10 + $0x4f0] sm:$0xff]
    %v773 = vld [vmem:[#allocation10 + $0x4f8] sm:$0xff]
    %v774 = vld [vmem:[#allocation10 + $0x500] sm:$0xff]
    %v775 = vld [vmem:[#allocation10 + $0x508] sm:$0xff]
    %v776 = vld [vmem:[#allocation10 + $0x510] sm:$0xff]
    %v777 = vld [vmem:[#allocation10 + $0x518] sm:$0xff]
    %v778 = vld [vmem:[#allocation10 + $0x520] sm:$0xff]
    %v779 = vld [vmem:[#allocation10 + $0x528] sm:$0xff]
    %v780 = vld [vmem:[#allocation10 + $0x530] sm:$0xff]
    %v781 = vld [vmem:[#allocation10 + $0x538] sm:$0xff]
    %v782 = vld [vmem:[#allocation10 + $0x540] sm:$0xff]
    %v783 = vld [vmem:[#allocation10 + $0x548] sm:$0xff]
    %v784 = vld [vmem:[#allocation10 + $0x550] sm:$0xff]
    %v785 = vld [vmem:[#allocation10 + $0x558] sm:$0xff]
    %v786 = vld [vmem:[#allocation10 + $0x560] sm:$0xff]
    %v787 = vld [vmem:[#allocation10 + $0x568] sm:$0xff]
    %v788 = vld [vmem:[#allocation10 + $0x570] sm:$0xff]
    %v789 = vld [vmem:[#allocation10 + $0x578] sm:$0xff]
    %v790 = vld [vmem:[#allocation10 + $0x580] sm:$0xff]
    %v791 = vld [vmem:[#allocation10 + $0x588] sm:$0xff]
    %v792 = vld [vmem:[#allocation10 + $0x590] sm:$0xff]
    %v793 = vld [vmem:[#allocation10 + $0x598] sm:$0xff]
    %v794 = vld [vmem:[#allocation10 + $0x5a0] sm:$0xff]
    %v795 = vld [vmem:[#allocation10 + $0x5a8] sm:$0xff]
    %v796 = vld [vmem:[#allocation10 + $0x5b0] sm:$0xff]
    %v797 = vld [vmem:[#allocation10 + $0x5b8] sm:$0xff]
    %v798 = vld [vmem:[#allocation10 + $0x5c0] sm:$0xff]
    %v799 = vld [vmem:[#allocation10 + $0x5c8] sm:$0xff]
    %v800 = vld [vmem:[#allocation10 + $0x5d0] sm:$0xff]
    %v801 = vld [vmem:[#allocation10 + $0x5d8] sm:$0xff]
    %v802 = vld [vmem:[#allocation10 + $0x5e0] sm:$0xff]
    %v803 = vld [vmem:[#allocation10 + $0x5e8] sm:$0xff]
    %v804 = vld [vmem:[#allocation10 + $0x5f0] sm:$0xff]
    %v805 = vld [vmem:[#allocation10 + $0x5f8] sm:$0xff]
    %v806 = vld [vmem:[#allocation10 + $0x600] sm:$0xff]
    %v807 = vld [vmem:[#allocation10 + $0x608] sm:$0xff]
    %v808 = vld [vmem:[#allocation10 + $0x610] sm:$0xff]
    %v809 = vld [vmem:[#allocation10 + $0x618] sm:$0xff]
    %v810 = vld [vmem:[#allocation10 + $0x620] sm:$0xff]
    %v811 = vld [vmem:[#allocation10 + $0x628] sm:$0xff]
    %v812 = vld [vmem:[#allocation10 + $0x630] sm:$0xff]
    %v813 = vld [vmem:[#allocation10 + $0x638] sm:$0xff]
    %v814 = vld [vmem:[#allocation10 + $0x640] sm:$0xff]
    %v815 = vld [vmem:[#allocation10 + $0x648] sm:$0xff]
    %v816 = vld [vmem:[#allocation10 + $0x650] sm:$0xff]
    %v817 = vld [vmem:[#allocation10 + $0x658] sm:$0xff]
    %v818 = vld [vmem:[#allocation10 + $0x660] sm:$0xff]
    %v819 = vld [vmem:[#allocation10 + $0x668] sm:$0xff]
    %v820 = vld [vmem:[#allocation10 + $0x670] sm:$0xff]
    %v821 = vld [vmem:[#allocation10 + $0x678] sm:$0xff]
    %v822 = vld [vmem:[#allocation10 + $0x680] sm:$0xff]
    %v823 = vld [vmem:[#allocation10 + $0x688] sm:$0xff]
    %v824 = vld [vmem:[#allocation10 + $0x690] sm:$0xff]
    %v825 = vld [vmem:[#allocation10 + $0x698] sm:$0xff]
    %v826 = vld [vmem:[#allocation10 + $0x6a0] sm:$0xff]
    %v827 = vld [vmem:[#allocation10 + $0x6a8] sm:$0xff]
    %v828 = vld [vmem:[#allocation10 + $0x6b0] sm:$0xff]
    %v829 = vld [vmem:[#allocation10 + $0x6b8] sm:$0xff]
    %v830 = vld [vmem:[#allocation10 + $0x6c0] sm:$0xff]
    %v831 = vld [vmem:[#allocation10 + $0x6c8] sm:$0xff]
    %v832 = vld [vmem:[#allocation10 + $0x6d0] sm:$0xff]
    %v833 = vld [vmem:[#allocation10 + $0x6d8] sm:$0xff]
    %v834 = vld [vmem:[#allocation10 + $0x6e0] sm:$0xff]
    %v835 = vld [vmem:[#allocation10 + $0x6e8] sm:$0xff]
    %v836 = vld [vmem:[#allocation10 + $0x6f0] sm:$0xff]
    %v837 = vld [vmem:[#allocation10 + $0x6f8] sm:$0xff]
    %838 = vmatprep.subr.mxu0 %v720
    %839 = vmatpush1.msra.mxu0 %v719
    %840 = vmatprep.subr.mxu0 %v713
    %841 = vmatpush1.msra.mxu0 %v712
    %842 = vmatprep.subr.mxu0 %v706
    %843 = vmatpush1.msra.mxu0 %v705
    %844 = vmatprep.subr.mxu0 %v699
    %845 = vmatpush1.msra.mxu0 %v698
    %846 = vmatprep.subr.mxu0 %v692
    %847 = vmatpush1.msra.mxu0 %v691
    %848 = vmatprep.subr.mxu0 %v685
    %849 = vmatpush1.msra.mxu0 %v684
    %850 = vmatprep.subr.mxu0 %v678
    %851 = vmatpush1.msra.mxu0 %v677
    %852 = vmatprep.subr.mxu0 %v671
    %853 = vmatpush1.msra.mxu0 %v670
    %854 = vmatprep.subr.mxu0 %v664
    %855 = vmatpush1.msra.mxu0 %v663
    %856 = vmatprep.subr.mxu0 %v657
    %857 = vmatpush1.msra.mxu0 %v656
    %858 = vmatprep.subr.mxu0 %v650
    %859 = vmatpush1.msra.mxu0 %v649
    %860 = vmatprep.subr.mxu0 %v643
    %861 = vmatpush1.msra.mxu0 %v642
    %862 = vmatprep.subr.mxu0 %v636
    %863 = vmatpush1.msra.mxu0 %v635
    %864 = vmatprep.subr.mxu0 %v629
    %865 = vmatpush1.msra.mxu0 %v628
    %866 = vmatprep.subr.mxu0 %v622
    %867 = vmatpush1.msra.mxu0 %v621
    %868 = vmatprep.subr.mxu0 %v615
    %869 = vmatpush1.msra.mxu0 %v614
    %870 = vmatprep.subr.mxu0 %v832
    %871 = vmatpush2.msra.mxu0 %v831
    %872 = vmatprep.subr.mxu0 %v825
    %873 = vmatpush2.msra.mxu0 %v824
    %874 = vmatprep.subr.mxu0 %v818
    %875 = vmatpush2.msra.mxu0 %v817
    %876 = vmatprep.subr.mxu0 %v811
    %877 = vmatpush2.msra.mxu0 %v810
    %878 = vmatprep.subr.mxu0 %v804
    %879 = vmatpush2.msra.mxu0 %v803
    %880 = vmatprep.subr.mxu0 %v797
    %881 = vmatpush2.msra.mxu0 %v796
    %882 = vmatprep.subr.mxu0 %v790
    %883 = vmatpush2.msra.mxu0 %v789
    %884 = vmatprep.subr.mxu0 %v783
    %885 = vmatpush2.msra.mxu0 %v782
    %886 = vmatprep.subr.mxu0 %v776
    %887 = vmatpush2.msra.mxu0 %v775
    %888 = vmatprep.subr.mxu0 %v769
    %889 = vmatpush2.msra.mxu0 %v768
    %890 = vmatprep.subr.mxu0 %v762
    %891 = vmatpush2.msra.mxu0 %v761
    %892 = vmatprep.subr.mxu0 %v755
    %893 = vmatpush2.msra.mxu0 %v754
    %894 = vmatprep.subr.mxu0 %v748
    %895 = vmatpush2.msra.mxu0 %v747
    %896 = vmatprep.subr.mxu0 %v741
    %897 = vmatpush2.msra.mxu0 %v740
    %898 = vmatprep.subr.mxu0 %v734
    %899 = vmatpush2.msra.mxu0 %v733
    %900 = vmatprep.subr.mxu0 %v727
    %901 = vmatpush2.msra.mxu0 %v726
    %902 = vmatprep.mubr.f32.mxu0 %v611
    %903 = vmatmul.mubr.f32.gmra.mxu0 %v610
    %v904 = vpop.f32.mrf.mxu0
    %v905 = vadd.f32 0.0, %v904
    %v906 = vpop.f32.mrf.mxu0
    %v907 = vadd.f32 0.0, %v906
    %908 = vmatprep.mubr.f32.mxu0 %v613
    %909 = vmatmul.mubr.f32.gmra.mxu0 %v612
    %v910 = vpop.f32.mrf.mxu0
    %v911 = vadd.f32 0.0, %v910
    %v912 = vpop.f32.mrf.mxu0
    %v913 = vadd.f32 0.0, %v912
    %914 = vdwg.mxu0
    %915 = vmatprep.subr.mxu0 %v722
    %916 = vmatpush1.msra.mxu0 %v721
    %917 = vmatprep.subr.mxu0 %v715
    %918 = vmatpush1.msra.mxu0 %v714
    %919 = vmatprep.subr.mxu0 %v708
    %920 = vmatpush1.msra.mxu0 %v707
    %921 = vmatprep.subr.mxu0 %v701
    %922 = vmatpush1.msra.mxu0 %v700
    %923 = vmatprep.subr.mxu0 %v694
    %924 = vmatpush1.msra.mxu0 %v693
    %925 = vmatprep.subr.mxu0 %v687
    %926 = vmatpush1.msra.mxu0 %v686
    %927 = vmatprep.subr.mxu0 %v680
    %928 = vmatpush1.msra.mxu0 %v679
    %929 = vmatprep.subr.mxu0 %v673
    %930 = vmatpush1.msra.mxu0 %v672
    %931 = vmatprep.subr.mxu0 %v666
    %932 = vmatpush1.msra.mxu0 %v665
    %933 = vmatprep.subr.mxu0 %v659
    %934 = vmatpush1.msra.mxu0 %v658
    %935 = vmatprep.subr.mxu0 %v652
    %936 = vmatpush1.msra.mxu0 %v651
    %937 = vmatprep.subr.mxu0 %v645
    %938 = vmatpush1.msra.mxu0 %v644
    %939 = vmatprep.subr.mxu0 %v638
    %940 = vmatpush1.msra.mxu0 %v637
    %941 = vmatprep.subr.mxu0 %v631
    %942 = vmatpush1.msra.mxu0 %v630
    %943 = vmatprep.subr.mxu0 %v624
    %944 = vmatpush1.msra.mxu0 %v623
    %945 = vmatprep.subr.mxu0 %v617
    %946 = vmatpush1.msra.mxu0 %v616
    %947 = vmatprep.subr.mxu0 %v834
    %948 = vmatpush2.msra.mxu0 %v833
    %949 = vmatprep.subr.mxu0 %v827
    %950 = vmatpush2.msra.mxu0 %v826
    %951 = vmatprep.subr.mxu0 %v820
    %952 = vmatpush2.msra.mxu0 %v819
    %953 = vmatprep.subr.mxu0 %v813
    %954 = vmatpush2.msra.mxu0 %v812
    %955 = vmatprep.subr.mxu0 %v806
    %956 = vmatpush2.msra.mxu0 %v805
    %957 = vmatprep.subr.mxu0 %v799
    %958 = vmatpush2.msra.mxu0 %v798
    %959 = vmatprep.subr.mxu0 %v792
    %960 = vmatpush2.msra.mxu0 %v791
    %961 = vmatprep.subr.mxu0 %v785
    %962 = vmatpush2.msra.mxu0 %v784
    %963 = vmatprep.subr.mxu0 %v778
    %964 = vmatpush2.msra.mxu0 %v777
    %965 = vmatprep.subr.mxu0 %v771
    %966 = vmatpush2.msra.mxu0 %v770
    %967 = vmatprep.subr.mxu0 %v764
    %968 = vmatpush2.msra.mxu0 %v763
    %969 = vmatprep.subr.mxu0 %v757
    %970 = vmatpush2.msra.mxu0 %v756
    %971 = vmatprep.subr.mxu0 %v750
    %972 = vmatpush2.msra.mxu0 %v749
    %973 = vmatprep.subr.mxu0 %v743
    %974 = vmatpush2.msra.mxu0 %v742
    %975 = vmatprep.subr.mxu0 %v736
    %976 = vmatpush2.msra.mxu0 %v735
    %977 = vmatprep.subr.mxu0 %v729
    %978 = vmatpush2.msra.mxu0 %v728
    %979 = vmatprep.mubr.f32.mxu0 %v611
    %980 = vmatmul.mubr.f32.gmra.mxu0 %v610
    %v981 = vpop.f32.mrf.mxu0
    %v982 = vadd.f32 0.0, %v981
    %v983 = vpop.f32.mrf.mxu0
    %v984 = vadd.f32 0.0, %v983
    %985 = vmatprep.mubr.f32.mxu0 %v613
    %986 = vmatmul.mubr.f32.gmra.mxu0 %v612
    %v987 = vpop.f32.mrf.mxu0
    %v988 = vadd.f32 0.0, %v987
    %v989 = vpop.f32.mrf.mxu0
    %v990 = vadd.f32 0.0, %v989
    %991 = vdwg.mxu0
    %992 = vmatprep.subr.mxu0 %v724
    %993 = vmatpush1.msra.mxu0 %v723
    %994 = vmatprep.subr.mxu0 %v717
    %995 = vmatpush1.msra.mxu0 %v716
    %996 = vmatprep.subr.mxu0 %v710
    %997 = vmatpush1.msra.mxu0 %v709
    %998 = vmatprep.subr.mxu0 %v703
    %999 = vmatpush1.msra.mxu0 %v702
    %1000 = vmatprep.subr.mxu0 %v696
    %1001 = vmatpush1.msra.mxu0 %v695
    %1002 = vmatprep.subr.mxu0 %v689
    %1003 = vmatpush1.msra.mxu0 %v688
    %1004 = vmatprep.subr.mxu0 %v682
    %1005 = vmatpush1.msra.mxu0 %v681
    %1006 = vmatprep.subr.mxu0 %v675
    %1007 = vmatpush1.msra.mxu0 %v674
    %1008 = vmatprep.subr.mxu0 %v668
    %1009 = vmatpush1.msra.mxu0 %v667
    %1010 = vmatprep.subr.mxu0 %v661
    %1011 = vmatpush1.msra.mxu0 %v660
    %1012 = vmatprep.subr.mxu0 %v654
    %1013 = vmatpush1.msra.mxu0 %v653
    %1014 = vmatprep.subr.mxu0 %v647
    %1015 = vmatpush1.msra.mxu0 %v646
    %1016 = vmatprep.subr.mxu0 %v640
    %1017 = vmatpush1.msra.mxu0 %v639
    %1018 = vmatprep.subr.mxu0 %v633
    %1019 = vmatpush1.msra.mxu0 %v632
    %1020 = vmatprep.subr.mxu0 %v626
    %1021 = vmatpush1.msra.mxu0 %v625
    %1022 = vmatprep.subr.mxu0 %v619
    %1023 = vmatpush1.msra.mxu0 %v618
    %1024 = vmatprep.subr.mxu0 %v836
    %1025 = vmatpush2.msra.mxu0 %v835
    %1026 = vmatprep.subr.mxu0 %v829
    %1027 = vmatpush2.msra.mxu0 %v828
    %1028 = vmatprep.subr.mxu0 %v822
    %1029 = vmatpush2.msra.mxu0 %v821
    %1030 = vmatprep.subr.mxu0 %v815
    %1031 = vmatpush2.msra.mxu0 %v814
    %1032 = vmatprep.subr.mxu0 %v808
    %1033 = vmatpush2.msra.mxu0 %v807
    %1034 = vmatprep.subr.mxu0 %v801
    %1035 = vmatpush2.msra.mxu0 %v800
    %1036 = vmatprep.subr.mxu0 %v794
    %1037 = vmatpush2.msra.mxu0 %v793
    %1038 = vmatprep.subr.mxu0 %v787
    %1039 = vmatpush2.msra.mxu0 %v786
    %1040 = vmatprep.subr.mxu0 %v780
    %1041 = vmatpush2.msra.mxu0 %v779
    %1042 = vmatprep.subr.mxu0 %v773
    %1043 = vmatpush2.msra.mxu0 %v772
    %1044 = vmatprep.subr.mxu0 %v766
    %1045 = vmatpush2.msra.mxu0 %v765
    %1046 = vmatprep.subr.mxu0 %v759
    %1047 = vmatpush2.msra.mxu0 %v758
    %1048 = vmatprep.subr.mxu0 %v752
    %1049 = vmatpush2.msra.mxu0 %v751
    %1050 = vmatprep.subr.mxu0 %v745
    %1051 = vmatpush2.msra.mxu0 %v744
    %1052 = vmatprep.subr.mxu0 %v738
    %1053 = vmatpush2.msra.mxu0 %v737
    %1054 = vmatprep.subr.mxu0 %v731
    %1055 = vmatpush2.msra.mxu0 %v730
    %1056 = vmatprep.mubr.f32.mxu0 %v611
    %1057 = vmatmul.mubr.f32.gmra.mxu0 %v610
    %v1058 = vpop.f32.mrf.mxu0
    %v1059 = vadd.f32 0.0, %v1058
    %v1060 = vpop.f32.mrf.mxu0
    %v1061 = vadd.f32 0.0, %v1060
    %1062 = vmatprep.mubr.f32.mxu0 %v613
    %1063 = vmatmul.mubr.f32.gmra.mxu0 %v612
    %v1064 = vpop.f32.mrf.mxu0
    %v1065 = vadd.f32 0.0, %v1064
    %v1066 = vpop.f32.mrf.mxu0
    %v1067 = vadd.f32 0.0, %v1066
    %1068 = vdwg.mxu0
    %1069 = vmatprep.subr.mxu0 0.0
    %1070 = vmatpush1.msra.mxu0 %v725
    %1071 = vmatprep.subr.mxu0 0.0
    %1072 = vmatpush1.msra.mxu0 %v718
    %1073 = vmatprep.subr.mxu0 0.0
    %1074 = vmatpush1.msra.mxu0 %v711
    %1075 = vmatprep.subr.mxu0 0.0
    %1076 = vmatpush1.msra.mxu0 %v704
    %1077 = vmatprep.subr.mxu0 0.0
    %1078 = vmatpush1.msra.mxu0 %v697
    %1079 = vmatprep.subr.mxu0 0.0
    %1080 = vmatpush1.msra.mxu0 %v690
    %1081 = vmatprep.subr.mxu0 0.0
    %1082 = vmatpush1.msra.mxu0 %v683
    %1083 = vmatprep.subr.mxu0 0.0
    %1084 = vmatpush1.msra.mxu0 %v676
    %1085 = vmatprep.subr.mxu0 0.0
    %1086 = vmatpush1.msra.mxu0 %v669
    %1087 = vmatprep.subr.mxu0 0.0
    %1088 = vmatpush1.msra.mxu0 %v662
    %1089 = vmatprep.subr.mxu0 0.0
    %1090 = vmatpush1.msra.mxu0 %v655
    %1091 = vmatprep.subr.mxu0 0.0
    %1092 = vmatpush1.msra.mxu0 %v648
    %1093 = vmatprep.subr.mxu0 0.0
    %1094 = vmatpush1.msra.mxu0 %v641
    %1095 = vmatprep.subr.mxu0 0.0
    %1096 = vmatpush1.msra.mxu0 %v634
    %1097 = vmatprep.subr.mxu0 0.0
    %1098 = vmatpush1.msra.mxu0 %v627
    %1099 = vmatprep.subr.mxu0 0.0
    %1100 = vmatpush1.msra.mxu0 %v620
    %1101 = vmatprep.subr.mxu0 0.0
    %1102 = vmatpush2.msra.mxu0 %v837
    %1103 = vmatprep.subr.mxu0 0.0
    %1104 = vmatpush2.msra.mxu0 %v830
    %1105 = vmatprep.subr.mxu0 0.0
    %1106 = vmatpush2.msra.mxu0 %v823
    %1107 = vmatprep.subr.mxu0 0.0
    %1108 = vmatpush2.msra.mxu0 %v816
    %1109 = vmatprep.subr.mxu0 0.0
    %1110 = vmatpush2.msra.mxu0 %v809
    %1111 = vmatprep.subr.mxu0 0.0
    %1112 = vmatpush2.msra.mxu0 %v802
    %1113 = vmatprep.subr.mxu0 0.0
    %1114 = vmatpush2.msra.mxu0 %v795
    %1115 = vmatprep.subr.mxu0 0.0
    %1116 = vmatpush2.msra.mxu0 %v788
    %1117 = vmatprep.subr.mxu0 0.0
    %1118 = vmatpush2.msra.mxu0 %v781
    %1119 = vmatprep.subr.mxu0 0.0
    %1120 = vmatpush2.msra.mxu0 %v774
    %1121 = vmatprep.subr.mxu0 0.0
    %1122 = vmatpush2.msra.mxu0 %v767
    %1123 = vmatprep.subr.mxu0 0.0
    %1124 = vmatpush2.msra.mxu0 %v760
    %1125 = vmatprep.subr.mxu0 0.0
    %1126 = vmatpush2.msra.mxu0 %v753
    %1127 = vmatprep.subr.mxu0 0.0
    %1128 = vmatpush2.msra.mxu0 %v746
    %1129 = vmatprep.subr.mxu0 0.0
    %1130 = vmatpush2.msra.mxu0 %v739
    %1131 = vmatprep.subr.mxu0 0.0
    %1132 = vmatpush2.msra.mxu0 %v732
    %1133 = vmatprep.mubr.f32.mxu0 %v611
    %1134 = vmatmul.mubr.f32.gmra.mxu0 %v610
    %v1135 = vpop.f32.mrf.mxu0
    %v1136 = vadd.f32 0.0, %v1135
    %v1137 = vpop.f32.mrf.mxu0
    %1138 = vmatprep.mubr.f32.mxu0 %v613
    %1139 = vmatmul.mubr.f32.gmra.mxu0 %v612
    %v1140 = vpop.f32.mrf.mxu0
    %v1141 = vadd.f32 0.0, %v1140
    %v1142 = vpop.f32.mrf.mxu0
    %1143 = vdwg.mxu0
    %v1144 = vadd.f32 %v252, %v905
    %v1145 = vadd.f32 %v254, %v907
    %v1146 = vadd.f32 %v329, %v982
    %v1147 = vadd.f32 %v331, %v984
    %v1148 = vadd.f32 %v406, %v1059
    %v1149 = vadd.f32 %v408, %v1061
    %v1150 = vadd.f32 %v483, %v1136
    %v1151 = vadd.f32 %v258, %v911
    %v1152 = vadd.f32 %v260, %v913
    %v1153 = vadd.f32 %v335, %v988
    %v1154 = vadd.f32 %v337, %v990
    %v1155 = vadd.f32 %v412, %v1065
    %v1156 = vadd.f32 %v414, %v1067
    %v1157 = vadd.f32 %v488, %v1141
    %1158 = vst [vmem:[#allocation11] sm:$0xff] %v1144
    %1159 = vst [vmem:[#allocation11 + $0x8] sm:$0xff] %v1145
    %1160 = vst [vmem:[#allocation11 + $0x10] sm:$0xff] %v1146
    %1161 = vst [vmem:[#allocation11 + $0x18] sm:$0xff] %v1147
    %1162 = vst [vmem:[#allocation11 + $0x20] sm:$0xff] %v1148
    %1163 = vst [vmem:[#allocation11 + $0x28] sm:$0xff] %v1149
    %1164 = vst [vmem:[#allocation11 + $0x30] sm:$0xff] %v1150
    %1165 = vst [vmem:[#allocation11 + $0x38] sm:$0xff] %v1151
    %1166 = vst [vmem:[#allocation11 + $0x40] sm:$0xff] %v1152
    %1167 = vst [vmem:[#allocation11 + $0x48] sm:$0xff] %v1153
    %1168 = vst [vmem:[#allocation11 + $0x50] sm:$0xff] %v1154
    %1169 = vst [vmem:[#allocation11 + $0x58] sm:$0xff] %v1155
    %1170 = vst [vmem:[#allocation11 + $0x60] sm:$0xff] %v1156
    %1171 = vst [vmem:[#allocation11 + $0x68] sm:$0xff] %v1157
    // Predicated region
    $region46: #{tpu_custom_call.1} parent=1 // pred_check
      _
    $region47: #{tpu_custom_call.1} parent=1 // pred_check_branch
      %1173 = sbr.rel (0) target = $region49
    $region48: #{tpu_custom_call.1} parent=1 // pred_region
      %s1175 = ssub.s32 1792, 1792
      %1176 = vsyncadd [#allocation4], %s1175
      %s1177 = sshll.u32 [#allocation11], 4
      %s1178 = int_to_ptr.vmem [resolvable:$true] %s1177
      %1183 = dma.vmem_to_hbm [thread:$0]  %s1178, 1792, %s6, [#allocation4], 896, 896, 56
    $region49: #{tpu_custom_call.1} parent=1 // pred_fallthru
      _
    // Predicated region
    $region50: #{tpu_custom_call.1} parent=1 // pred_check
      _
    $region51: #{tpu_custom_call.1} parent=1 // pred_check_branch
      %1185 = sbr.rel (0) target = $region53
    $region52: #{tpu_custom_call.1} parent=1 // pred_region
      %1186 = dma.done [#allocation4], 1792
    $region53: #{tpu_custom_call.1} parent=1 // pred_fallthru
      _
    %1187 = vsyncpa [#allocation3], 1
    %1188 = vsyncpa [#allocation6], 1
    %1189 = vsyncpa [#allocation9], 1
    %1190 = vsyncpa [#allocation4], 1

</llo_original>
